<compile_context>
chip_gen: v5e
topology: v5e:2x2
jax: 0.10.0
libtpu: 0.0.40
codegen_flags: <defaults>
</compile_context>

<pallas_src>
import numpy as np
import jax
import jax.numpy as jnp
from jax.experimental import pallas as pl
from jax.experimental.pallas import tpu as pltpu

NUM_AA_CLASSES = 21  # arange(21) in the reference embed()


def _onehot_embed_kernel(data_ref, rep_ref, cls_ref, out_ref):
    """One S-tile of the lane-dense one-hot embedding.

    data_ref: [TILE_S, B_pad]      int32 amino-acid IDs (0 = padding)
    rep_ref : [B_pad, B_pad*21]    f32 replication matrix, rep[b, L] = (L//21 == b)
    cls_ref : [1, B_pad*21]        f32 class index per lane, cls[L] = L % 21
    out_ref : [TILE_S, B_pad*21]   f32 one-hot, out[s, b*21 + c] = (ids[s, b] == c)
    """
    ids_f = data_ref[...].astype(jnp.float32)                       # (TS, B)
    # Replicate each id 21x along lanes with one small MXU matmul (lane-dense,
    # no in-register reshape / gather needed).  Values stay exact integers.
    ids_rep = jnp.dot(ids_f, rep_ref[...],
                      preferred_element_type=jnp.float32)           # (TS, B*21)
    diff = ids_rep - cls_ref[...]                                   # broadcast (1, B*21)
    out_ref[...] = (jnp.abs(diff) < 0.5).astype(jnp.float32)


def _round_up(x, m):
    return ((x + m - 1) // m) * m


def embed(original_aa_string, tile_s=None):
    """Pallas equivalent of BaseModel.embed.

    original_aa_string: list of 1-D int arrays (variable lengths).
    Returns: float32 [max_len, batch, 21] one-hot embedding (matches PyTorch).
    """
    batch = len(original_aa_string)
    seqs_np = [np.asarray(s, dtype=np.int32) for s in original_aa_string]
    max_len = max(int(s.shape[0]) for s in seqs_np)

    b_pad = _round_up(batch, 8)            # sublane alignment for the int32 input
    b21 = b_pad * NUM_AA_CLASSES           # lane-dense output row width

    if tile_s is None:
        # Keep each (double-buffered) output tile <= ~8 MiB so 2 out + 2 in
        # buffers fit comfortably under v7x's 32 MiB default scoped VMEM.
        bytes_per_row = b21 * 4
        cap_rows = max(8, ((8 * 1024 * 1024) // bytes_per_row) // 8 * 8)
        tile_s = min(512, cap_rows, _round_up(max_len, 8))
        tile_s = max(8, (tile_s // 8) * 8)
    s_pad = _round_up(max_len, tile_s)

    # Host-side numpy padding: one dense [S_pad, B_pad] int32 array, one H2D copy.
    data_np = np.zeros((s_pad, b_pad), dtype=np.int32)
    for j, a in enumerate(seqs_np):
        data_np[: a.shape[0], j] = a
    data = jnp.asarray(data_np)

    # Tiny constants (resident in VMEM across all grid steps).
    lane = np.arange(b21)
    rep_np = (lane[None, :] // NUM_AA_CLASSES
              == np.arange(b_pad)[:, None]).astype(np.float32)       # (B_pad, B21)
    cls_np = (lane % NUM_AA_CLASSES).astype(np.float32)[None, :]     # (1, B21)
    rep = jnp.asarray(rep_np)
    cls = jnp.asarray(cls_np)

    grid = (s_pad // tile_s,)
    out2d = pl.pallas_call(
        _onehot_embed_kernel,
        out_shape=jax.ShapeDtypeStruct((s_pad, b21), jnp.float32),
        grid=grid,
        in_specs=[
            pl.BlockSpec((tile_s, b_pad), lambda i: (i, 0)),
            pl.BlockSpec((b_pad, b21), lambda i: (0, 0)),
            pl.BlockSpec((1, b21), lambda i: (0, 0)),
        ],
        out_specs=pl.BlockSpec((tile_s, b21), lambda i: (i, 0)),
        compiler_params=pltpu.CompilerParams(
            dimension_semantics=("parallel",),
        ),
    )(data, rep, cls)

    # Free contiguous reshape [S_pad, B_pad*21] -> [S_pad, B_pad, 21], then
    # slice away the padding to return exactly [max_len, batch, 21].
    out = out2d.reshape(s_pad, b_pad, NUM_AA_CLASSES)[:max_len, :batch, :]
    return out


class BaseModelPallas:
    """Mirror of the PyTorch BaseModel (no trainable parameters in __init__)."""

    def __init__(self, use_gpu, embedding_size):
        self.use_gpu = use_gpu
        self.embedding_size = embedding_size
        self.historical_rmsd_avg_values = []
        self.historical_drmsd_avg_values = []

    def get_embedding_size(self):
        return self.embedding_size

    def embed(self, original_aa_string):
        return embed(original_aa_string)

    def forward(self, original_aa_string):
        # TODO(synk): _get_network_emissions is abstract in BaseModel; expose
        # the concrete embed() compute (the only defined hot path) instead.
        return self.embed(original_aa_string)


def _reference_embed(original_aa_string):
    seqs_np = [np.asarray(s, dtype=np.int32) for s in original_aa_string]
    max_len = max(int(s.shape[0]) for s in seqs_np)
    padded = np.zeros((len(seqs_np), max_len), dtype=np.int32)
    for j, a in enumerate(seqs_np):
        padded[j, : a.shape[0]] = a
    data = jnp.asarray(padded.T)                      # [max_len, batch]
    return jax.nn.one_hot(data, NUM_AA_CLASSES, dtype=jnp.float32)


if __name__ == "__main__":
    key = jax.random.PRNGKey(0)
    k1, k2, k3, k4 = jax.random.split(key, 4)

    # Small case: two variable-length amino-acid ID sequences (values 1..20).
    seq_a = jax.random.randint(k1, (8,), 1, 21, dtype=jnp.int32)
    seq_b = jax.random.randint(k2, (5,), 1, 21, dtype=jnp.int32)
    seqs = [seq_a, seq_b]

    model = BaseModelPallas(use_gpu=False, embedding_size=NUM_AA_CLASSES)
    out = jax.block_until_ready(model.forward(seqs))
    ref = _reference_embed(seqs)
    assert out.shape == (8, 2, NUM_AA_CLASSES)
    assert jnp.allclose(out, ref)

    # Second case exercising the multi-tile (grid > 1) pipelined path.
    seq_c = jax.random.randint(k3, (40,), 1, 21, dtype=jnp.int32)
    seq_d = jax.random.randint(k4, (33,), 1, 21, dtype=jnp.int32)
    seqs2 = [seq_c, seq_d]
    out2 = jax.block_until_ready(embed(seqs2, tile_s=16))
    ref2 = _reference_embed(seqs2)
    assert out2.shape == (40, 2, NUM_AA_CLASSES)
    assert jnp.allclose(out2, ref2)

    print("KERNEL_OK")
</pallas_src>

<mosaic_0001>
module attributes {stable_mosaic.version = 11 : i64} {
  func.func @_onehot_embed_kernel(%arg0: i32, %arg1: memref<8x8xi32, #tpu.memory_space<vmem>>, %arg2: memref<8x168xf32, #tpu.memory_space<vmem>>, %arg3: memref<1x168xf32, #tpu.memory_space<vmem>>, %arg4: memref<8x168xf32, #tpu.memory_space<vmem>>) attributes {dimension_semantics = [#tpu.dimension_semantics<parallel>], iteration_bounds = array<i64: 1>, scalar_prefetch = 0 : i64, scratch_operands = 0 : i64, tpu.core_type = #tpu.core_type<tc>, window_params = [{transform_indices = @transform_0, window_bounds = array<i64: 8, 8>}, {pipeline_mode = #tpu.pipeline_mode<synchronous>, transform_indices = @transform_1, window_bounds = array<i64: 8, 168>}, {pipeline_mode = #tpu.pipeline_mode<synchronous>, transform_indices = @transform_2, window_bounds = array<i64: 1, 168>}, {transform_indices = @transform_3, window_bounds = array<i64: 8, 168>}]} {
    %c0 = arith.constant 0 : index
    %c0_0 = arith.constant 0 : index
    %0 = vector.load %arg1[%c0, %c0_0] : memref<8x8xi32, #tpu.memory_space<vmem>>, vector<8x8xi32>
    %1 = arith.sitofp %0 : vector<8x8xi32> to vector<8x8xf32>
    %c0_1 = arith.constant 0 : index
    %c0_2 = arith.constant 0 : index
    %2 = vector.load %arg2[%c0_1, %c0_2] : memref<8x168xf32, #tpu.memory_space<vmem>>, vector<8x168xf32>
    %cst = arith.constant dense<0.000000e+00> : vector<8x168xf32>
    %3 = tpu.matmul %1, %2, %cst {dimension_numbers = #tpu.dot_dimension_numbers<[1], [0], [0], [1], [0, 0, 1, 1], [], []>} : vector<8x8xf32>, vector<8x168xf32>, vector<8x168xf32> -> vector<8x168xf32>
    %c0_3 = arith.constant 0 : index
    %c0_4 = arith.constant 0 : index
    %4 = vector.load %arg3[%c0_3, %c0_4] : memref<1x168xf32, #tpu.memory_space<vmem>>, vector<1x168xf32>
    %5 = vector.broadcast %4 : vector<1x168xf32> to vector<8x168xf32>
    %6 = arith.subf %3, %5 : vector<8x168xf32>
    %7 = math.absf %6 : vector<8x168xf32>
    %cst_5 = arith.constant 5.000000e-01 : f32
    %8 = vector.broadcast %cst_5 : f32 to vector<8x168xf32>
    %9 = arith.cmpf olt, %7, %8 : vector<8x168xf32>
    %10 = arith.extui %9 : vector<8x168xi1> to vector<8x168xi32>
    %11 = arith.sitofp %10 : vector<8x168xi32> to vector<8x168xf32>
    %c0_6 = arith.constant 0 : index
    %c0_7 = arith.constant 0 : index
    %12 = vector.load %arg4[%c0_6, %c0_7] : memref<8x168xf32, #tpu.memory_space<vmem>>, vector<8x168xf32>
    tpu.vector_store %arg4[%c0_6, %c0_7], %11 {strides = array<i32>} : memref<8x168xf32, #tpu.memory_space<vmem>>, vector<8x168xf32>,
    return
  }
  func.func @transform_0(%arg0: i32) -> (i32, i32) {
    %c0_i32 = arith.constant 0 : i32
    %c0_i32_0 = arith.constant 0 : i32
    return %arg0, %c0_i32 : i32, i32
  }
  func.func @transform_1(%arg0: i32) -> (i32, i32) {
    %c0_i32 = arith.constant 0 : i32
    %c0_i32_0 = arith.constant 0 : i32
    %c0_i32_1 = arith.constant 0 : i32
    return %c0_i32, %c0_i32_0 : i32, i32
  }
  func.func @transform_2(%arg0: i32) -> (i32, i32) {
    %c0_i32 = arith.constant 0 : i32
    %c0_i32_0 = arith.constant 0 : i32
    %c0_i32_1 = arith.constant 0 : i32
    return %c0_i32, %c0_i32_0 : i32, i32
  }
  func.func @transform_3(%arg0: i32) -> (i32, i32) {
    %c0_i32 = arith.constant 0 : i32
    %c0_i32_0 = arith.constant 0 : i32
    return %arg0, %c0_i32 : i32, i32
  }
}

</mosaic_0001>

<llo_original>
// kernel: tpu_custom_call.1
$region0: #{tpu_custom_call.1}
  #allocation0 [shape = 'u32[]', space=smem, size = 0x4, offset = 0x4, fixed_abs, tag = 'smem constant byte address 0x4 - core index']
  #allocation1 [shape = 'u32[72,128]{1,0:T(1,128)}', space=vmem, size = 0x9000, scoped, tag = 'internal scratch']
  %s0 = inlined_call_operand.hbm [shape: s32[8,8], index: 0, kind: input, shape index: {}]
  %s1 = inlined_call_operand.hbm [shape: f32[8,168], index: 1, kind: input, shape index: {}]
  %s2 = inlined_call_operand.hbm [shape: f32[1,168], index: 2, kind: input, shape index: {}]
  %s3 = inlined_call_operand.hbm [shape: f32[8,168], index: 3, kind: output, shape index: {}]
  %s4 = sld [smem:[#allocation0]]
  $region34: #{tpu_custom_call.1} parent=0
    _
  %s6 = ssub.s32 1, %s4
  %s7 = scalar_select 0, %s6, %s4
  $region1: #{tpu_custom_call.1} parent=0
    #allocation2 [shape = 'u8[4096]{0}', space=vmem, size = 0x1000, scoped, tag = 'input window, operand 0, single buffered']
    #allocation3 [shape = 's32[1]{0}', space=sflag, size = 0x4, scoped, tag = 'scoped memory for tpu_custom_call.1']
    #allocation4 [shape = 's32[1]{0}', space=sflag, size = 0x4, scoped, tag = 'scoped memory for tpu_custom_call.1']
    #allocation5 [shape = 'u8[8192]{0}', space=vmem, size = 0x2000, scoped, tag = 'input window, operand 1, single buffered']
    #allocation6 [shape = 's32[1]{0}', space=sflag, size = 0x4, scoped, tag = 'scoped memory for tpu_custom_call.1']
    #allocation7 [shape = 'u8[1024]{0}', space=vmem, size = 0x400, scoped, tag = 'input window, operand 2, single buffered']
    #allocation8 [shape = 'u8[8192]{0}', space=vmem, size = 0x2000, scoped, tag = 'output window, operand 0, single buffered']
    %8 = vsyncpa [#allocation3], 0
    %9 = vsyncpa [#allocation6], 0
    %10 = vsyncpa [#allocation4], 0
    // Predicated region
    $region2: #{tpu_custom_call.1} parent=1 // pred_check
      _
    $region3: #{tpu_custom_call.1} parent=1 // pred_check_branch
      %12 = sbr.rel (0) target = $region5
    $region4: #{tpu_custom_call.1} parent=1 // pred_region
      %14 = vsyncadd [#allocation3], 0
      %s16 = sshll.u32 %s0, 4
      %s17 = int_to_ptr.hbm [resolvable:$true] %s16
      %s18 = sshll.u32 [#allocation2], 4
      %s19 = int_to_ptr.vmem [resolvable:$true] %s18
      %21 = dma.hbm_to_vmem [thread:$0]  %s17, 128, %s19, [#allocation3]
    $region5: #{tpu_custom_call.1} parent=1 // pred_fallthru
      _
    // Predicated region
    $region6: #{tpu_custom_call.1} parent=1 // pred_check
      _
    $region7: #{tpu_custom_call.1} parent=1 // pred_check_branch
      %23 = sbr.rel (0) target = $region9
    $region8: #{tpu_custom_call.1} parent=1 // pred_region
      %25 = vsyncadd [#allocation6], 0
      %s27 = sshll.u32 %s1, 4
      %s28 = int_to_ptr.hbm [resolvable:$true] %s27
      %s29 = sshll.u32 [#allocation5], 4
      %s30 = int_to_ptr.vmem [resolvable:$true] %s29
      %32 = dma.hbm_to_vmem [thread:$0]  %s28, 256, %s30, [#allocation6]
    $region9: #{tpu_custom_call.1} parent=1 // pred_fallthru
      _
    // Predicated region
    $region10: #{tpu_custom_call.1} parent=1 // pred_check
      _
    $region11: #{tpu_custom_call.1} parent=1 // pred_check_branch
      %34 = sbr.rel (0) target = $region13
    $region12: #{tpu_custom_call.1} parent=1 // pred_region
      %36 = vsyncadd [#allocation6], 0
      %s38 = sshll.u32 %s2, 4
      %s39 = int_to_ptr.hbm [resolvable:$true] %s38
      %s40 = sshll.u32 [#allocation7], 4
      %s41 = int_to_ptr.vmem [resolvable:$true] %s40
      %43 = dma.hbm_to_vmem [thread:$0]  %s39, 32, %s41, [#allocation6]
    $region13: #{tpu_custom_call.1} parent=1 // pred_fallthru
      _
    // Predicated region
    $region14: #{tpu_custom_call.1} parent=1 // pred_check
      _
    $region15: #{tpu_custom_call.1} parent=1 // pred_check_branch
      %45 = sbr.rel (0) target = $region17
    $region16: #{tpu_custom_call.1} parent=1 // pred_region
      %47 = dma.done [#allocation3], 128
    $region17: #{tpu_custom_call.1} parent=1 // pred_fallthru
      _
    // Predicated region
    $region18: #{tpu_custom_call.1} parent=1 // pred_check
      _
    $region19: #{tpu_custom_call.1} parent=1 // pred_check_branch
      %49 = sbr.rel (0) target = $region21
    $region20: #{tpu_custom_call.1} parent=1 // pred_region
      %51 = dma.done [#allocation6], 256
    $region21: #{tpu_custom_call.1} parent=1 // pred_fallthru
      _
    // Predicated region
    $region22: #{tpu_custom_call.1} parent=1 // pred_check
      _
    $region23: #{tpu_custom_call.1} parent=1 // pred_check_branch
      %53 = sbr.rel (0) target = $region25
    $region24: #{tpu_custom_call.1} parent=1 // pred_region
      %55 = dma.done [#allocation6], 32
    $region25: #{tpu_custom_call.1} parent=1 // pred_fallthru
      _
    %v56 = vld [vmem:[#allocation2] sm:$0xff]
    %v57 = vcvt.s32.f32 %v56
    %v58 = vld [vmem:[#allocation5] sm:$0xff]
    %v59 = vld [vmem:[#allocation5 + $0x8] sm:$0xff]
    %vm60 = vcmask 64512
    %v62 = vsel %vm60, %v57, 0
    %64 = vmatpush.msra.mxu0 0.0
    %65 = vmatpush.msra.mxu0 0.0
    %66 = vmatpush.msra.mxu0 0.0
    %67 = vmatpush.msra.mxu0 0.0
    %68 = vmatpush.msra.mxu0 0.0
    %69 = vmatpush.msra.mxu0 0.0
    %70 = vmatpush.msra.mxu0 0.0
    %71 = vmatpush.msra.mxu0 0.0
    %72 = vmatpush.msra.mxu0 0.0
    %73 = vmatpush.msra.mxu0 0.0
    %74 = vmatpush.msra.mxu0 0.0
    %75 = vmatpush.msra.mxu0 0.0
    %76 = vmatpush.msra.mxu0 0.0
    %77 = vmatpush.msra.mxu0 0.0
    %78 = vmatpush.msra.mxu0 0.0
    %79 = vmatpush.msra.mxu0 %v58
    %80 = vmatmul.f32.gmra.mxu0 %v62
    %v81 = vpop.f32.mrf.mxu0
    %v82 = vadd.f32 0.0, %v81
    %83 = vdwg.mxu0
    %84 = vmatpush.msra.mxu0 0.0
    %85 = vmatpush.msra.mxu0 0.0
    %86 = vmatpush.msra.mxu0 0.0
    %87 = vmatpush.msra.mxu0 0.0
    %88 = vmatpush.msra.mxu0 0.0
    %89 = vmatpush.msra.mxu0 0.0
    %90 = vmatpush.msra.mxu0 0.0
    %91 = vmatpush.msra.mxu0 0.0
    %92 = vmatpush.msra.mxu0 0.0
    %93 = vmatpush.msra.mxu0 0.0
    %94 = vmatpush.msra.mxu0 0.0
    %95 = vmatpush.msra.mxu0 0.0
    %96 = vmatpush.msra.mxu0 0.0
    %97 = vmatpush.msra.mxu0 0.0
    %98 = vmatpush.msra.mxu0 0.0
    %99 = vmatpush.msra.mxu0 %v59
    %100 = vmatmul.f32.gmra.mxu0 %v62
    %v101 = vpop.f32.mrf.mxu0
    %v102 = vadd.f32 0.0, %v101
    %103 = vdwg.mxu0
    %v104 = vld [vmem:[#allocation7] sm:$0x3]
    %v106 = vperm.slane %v104, 0
    %v107 = vperm.slane %v104, 1
    %v110 = vsub.f32 %v82, %v106
    %v111 = vsub.f32 %v102, %v107
    %v112 = vand.u32 2147483647, %v110
    %v113 = vand.u32 2147483647, %v111
    %vm114 = vcmp.lt.f32.partialorder %v112, 0.5
    %vm115 = vcmp.lt.f32.partialorder %v113, 0.5
    %v116 = vsel %vm114, 1, 0
    %v117 = vsel %vm115, 1, 0
    %v118 = vcvt.s32.f32 %v116
    %v119 = vcvt.s32.f32 %v117
    %120 = vst [vmem:[#allocation8] sm:$0xff] %v118
    %vm121 = vcmask 326656
    %122 = vst.msk [vmem:[#allocation8 + $0x8] sm:$0xff] %vm121, %v119
    // Predicated region
    $region26: #{tpu_custom_call.1} parent=1 // pred_check
      _
    $region27: #{tpu_custom_call.1} parent=1 // pred_check_branch
      %124 = sbr.rel (0) target = $region29
    $region28: #{tpu_custom_call.1} parent=1 // pred_region
      %126 = vsyncadd [#allocation4], 0
      %s128 = sshll.u32 [#allocation8], 4
      %s129 = int_to_ptr.vmem [resolvable:$true] %s128
      %s130 = sshll.u32 %s3, 4
      %s131 = int_to_ptr.hbm [resolvable:$true] %s130
      %133 = dma.vmem_to_hbm [thread:$0]  %s129, 256, %s131, [#allocation4]
    $region29: #{tpu_custom_call.1} parent=1 // pred_fallthru
      _
    // Predicated region
    $region30: #{tpu_custom_call.1} parent=1 // pred_check
      _
    $region31: #{tpu_custom_call.1} parent=1 // pred_check_branch
      %135 = sbr.rel (0) target = $region33
    $region32: #{tpu_custom_call.1} parent=1 // pred_region
      %137 = dma.done [#allocation4], 256
    $region33: #{tpu_custom_call.1} parent=1 // pred_fallthru
      _
    %138 = vsyncpa [#allocation3], 1
    %139 = vsyncpa [#allocation6], 1
    %140 = vsyncpa [#allocation4], 1

</llo_original>
